<compile_context>
chip_gen: v5e
topology: v5e:2x2
jax: 0.10.0
libtpu: 0.0.40
codegen_flags: <defaults>
</compile_context>

<pallas_src>
import functools

import jax
import jax.numpy as jnp
from jax.experimental import pallas as pl
from jax.experimental.pallas import tpu as pltpu


# ------------------------------- kernel ------------------------------------ #

def kaiming_nn_kernel(x_ref, p0_ref, pm_ref, ph_ref, mean_ref, var_ref,
                      *, n_in, n_hid, n_mid):
    # x_ref:  (B, IN)            input
    # p0_ref: (IN+1, Hp)         [W0 ; b0]        first linear
    # pm_ref: (L, Hp+1, Hp)      stacked [Wl ; bl] remaining layer_stack linears
    # ph_ref: (Hp+1, 2)          [Wmean | Wvar ; bmean | bvar] fused heads
    # mean_ref/var_ref: (B, 1)

    x = x_ref[...]
    p0 = p0_ref[...]
    h = jnp.dot(x, p0[:n_in], preferred_element_type=jnp.float32) + p0[n_in:]
    h = jnp.maximum(h, 0.0)

    # remaining layer_stack linears: ReLU on all but the last (static unroll).
    for l in range(n_mid):
        p = pm_ref[l]                                   # (Hp+1, Hp)
        z = jnp.dot(h, p[:n_hid], preferred_element_type=jnp.float32) + p[n_hid:]
        h = jnp.maximum(z, 0.0) if l < n_mid - 1 else z

    # fused mean/var head: one (B, Hp) @ (Hp, 2) matmul.
    ph = ph_ref[...]
    y = jnp.dot(h, ph[:n_hid], preferred_element_type=jnp.float32) + ph[n_hid:]

    mean_ref[...] = y[:, 0:1].astype(mean_ref.dtype)
    v = y[:, 1:2]
    # numerically stable softplus (matches F.softplus, beta=1)
    # TODO(synk): softplus underflows to exactly 0.0 for v < ~-88 (f32); the
    # original module has the same behavior, so no epsilon is added here.
    var_ref[...] = (jnp.maximum(v, 0.0) + jnp.log1p(jnp.exp(-jnp.abs(v)))).astype(var_ref.dtype)


# ------------------------------- wrapper ------------------------------------ #

def _round_up(x, m):
    return ((x + m - 1) // m) * m


def pack_params(params, hidden_units):
    """Host-side one-time prep: pad hidden dim to a multiple of 128 and pack
    each linear's weight+bias into a single slab ([W ; b])."""
    H = hidden_units
    Hp = _round_up(H, 128)

    def pad_cols(a, width):
        return jnp.pad(a, ((0, 0), (0, width - a.shape[1])))

    def pad_rows(a, height):
        return jnp.pad(a, ((0, height - a.shape[0]), (0, 0)))

    # first linear: (IN, H) + (H,)
    w0 = pad_cols(params["w0"], Hp)                               # (IN, Hp)
    b0 = pad_cols(params["b0"][None, :], Hp)                      # (1, Hp)
    p0 = jnp.concatenate([w0, b0], axis=0)                        # (IN+1, Hp)

    # remaining layer_stack linears: (L, H, H) + (L, H)
    slabs = []
    for w, b in zip(params["wm"], params["bm"]):
        wp = pad_cols(pad_rows(w, Hp), Hp)                        # (Hp, Hp)
        bp = pad_cols(b[None, :], Hp)                             # (1, Hp)
        slabs.append(jnp.concatenate([wp, bp], axis=0))           # (Hp+1, Hp)
    pm = jnp.stack(slabs, axis=0)                                 # (L, Hp+1, Hp)

    # fused head: [Wmean | Wvar] (H, 2) + [bmean | bvar] (2,)
    wh = jnp.concatenate([params["w_mean"], params["w_var"]], axis=1)   # (H, 2)
    wh = pad_rows(wh, Hp)                                               # (Hp, 2)
    bh = jnp.concatenate([params["b_mean"], params["b_var"]])[None, :]  # (1, 2)
    ph = jnp.concatenate([wh, bh], axis=0)                              # (Hp+1, 2)

    return p0, pm, ph, Hp


def kaiming_nn_forward(x, params, *, hidden_layers, hidden_units):
    B, IN = x.shape
    L = hidden_layers
    p0, pm, ph, Hp = pack_params(params, hidden_units)

    kernel = functools.partial(kaiming_nn_kernel, n_in=IN, n_hid=Hp, n_mid=L)

    vmem = pl.BlockSpec(memory_space=pltpu.MemorySpace.VMEM)  # whole array in VMEM, no grid
    f = pl.pallas_call(
        kernel,
        out_shape=(
            jax.ShapeDtypeStruct((B, 1), jnp.float32),
            jax.ShapeDtypeStruct((B, 1), jnp.float32),
        ),
        in_specs=[vmem, vmem, vmem, vmem],
        out_specs=(vmem, vmem),
    )
    return f(x, p0, pm, ph)


# ------------------------ pure-JAX reference (for check) -------------------- #

def kaiming_nn_reference(x, params, *, hidden_layers):
    h = x @ params["w0"] + params["b0"]
    h = jnp.maximum(h, 0.0)
    for l in range(hidden_layers):
        z = h @ params["wm"][l] + params["bm"][l]
        h = jnp.maximum(z, 0.0) if l < hidden_layers - 1 else z
    mean = h @ params["w_mean"] + params["b_mean"]
    v = h @ params["w_var"] + params["b_var"]
    var = jnp.maximum(v, 0.0) + jnp.log1p(jnp.exp(-jnp.abs(v)))
    return mean, var


# ------------------------------- param init --------------------------------- #

def init_params(key, input_shape, hidden_layers, hidden_units):
    """Kaiming-normal weights (fan_in, ReLU gain), small random biases.
    Weights stored as (in_features, out_features) so forward is x @ W + b."""
    IN, H, L = input_shape, hidden_units, hidden_layers
    ks = jax.random.split(key, 10)
    g0 = jnp.sqrt(2.0 / IN)
    gh = jnp.sqrt(2.0 / H)
    return {
        "w0": g0 * jax.random.normal(ks[0], (IN, H), jnp.float32),
        "b0": 0.1 * jax.random.normal(ks[1], (H,), jnp.float32),
        # `hidden_layers` remaining layer_stack linears (last one has no ReLU)
        "wm": gh * jax.random.normal(ks[2], (L, H, H), jnp.float32),
        "bm": 0.1 * jax.random.normal(ks[3], (L, H), jnp.float32),
        "w_mean": gh * jax.random.normal(ks[4], (H, 1), jnp.float32),
        "b_mean": 0.1 * jax.random.normal(ks[5], (1,), jnp.float32),
        "w_var": gh * jax.random.normal(ks[6], (H, 1), jnp.float32),
        "b_var": 0.1 * jax.random.normal(ks[7], (1,), jnp.float32),
    }


# --------------------------------- main -------------------------------------- #

if __name__ == "__main__":
    input_shape = 8
    hidden_layers = 2
    hidden_units = 32
    batch = 8

    key = jax.random.PRNGKey(0)
    kx, kp = jax.random.split(key)
    x = jax.random.normal(kx, (batch, input_shape), jnp.float32)
    params = init_params(kp, input_shape, hidden_layers, hidden_units)

    mean, var = kaiming_nn_forward(x, params,
                                   hidden_layers=hidden_layers,
                                   hidden_units=hidden_units)
    mean, var = jax.block_until_ready((mean, var))

    mean_ref, var_ref = kaiming_nn_reference(x, params, hidden_layers=hidden_layers)

    assert mean.shape == (batch, 1)
    assert var.shape == (batch, 1)
    assert jnp.allclose(mean, mean_ref, atol=1e-4, rtol=1e-4)
    assert jnp.allclose(var, var_ref, atol=1e-4, rtol=1e-4)
    assert bool(jnp.all(var >= 0.0))

    print("KERNEL_OK")
</pallas_src>

<mosaic_0001>
module attributes {stable_mosaic.version = 11 : i64} {
  func.func @kaiming_nn_kernel(%arg0: memref<8x8xf32, #tpu.memory_space<vmem>>, %arg1: memref<9x128xf32, #tpu.memory_space<vmem>>, %arg2: memref<2x129x128xf32, #tpu.memory_space<vmem>>, %arg3: memref<129x2xf32, #tpu.memory_space<vmem>>, %arg4: memref<8x1xf32, #tpu.memory_space<vmem>>, %arg5: memref<8x1xf32, #tpu.memory_space<vmem>>) attributes {dimension_semantics = [], scalar_prefetch = 0 : i64, scratch_operands = 0 : i64, tpu.core_type = #tpu.core_type<tc>} {
    %c0 = arith.constant 0 : index
    %c0_0 = arith.constant 0 : index
    %0 = vector.load %arg0[%c0, %c0_0] : memref<8x8xf32, #tpu.memory_space<vmem>>, vector<8x8xf32>
    %c0_1 = arith.constant 0 : index
    %c0_2 = arith.constant 0 : index
    %1 = vector.load %arg1[%c0_1, %c0_2] : memref<9x128xf32, #tpu.memory_space<vmem>>, vector<9x128xf32>
    %2 = vector.extract_strided_slice %1 {offsets = [0, 0], sizes = [8, 128], strides = [1, 1]} : vector<9x128xf32> to vector<8x128xf32>
    %cst = arith.constant dense<0.000000e+00> : vector<8x128xf32>
    %3 = tpu.matmul %0, %2, %cst {dimension_numbers = #tpu.dot_dimension_numbers<[1], [0], [0], [1], [0, 0, 1, 1], [], []>} : vector<8x8xf32>, vector<8x128xf32>, vector<8x128xf32> -> vector<8x128xf32>
    %4 = vector.extract_strided_slice %1 {offsets = [8, 0], sizes = [1, 128], strides = [1, 1]} : vector<9x128xf32> to vector<1x128xf32>
    %5 = vector.broadcast %4 : vector<1x128xf32> to vector<8x128xf32>
    %6 = arith.addf %3, %5 : vector<8x128xf32>
    %cst_3 = arith.constant 0.000000e+00 : f32
    %7 = vector.broadcast %cst_3 : f32 to vector<8x128xf32>
    %8 = arith.maximumf %6, %7 : vector<8x128xf32>
    %c0_4 = arith.constant 0 : index
    %c0_5 = arith.constant 0 : index
    %c0_6 = arith.constant 0 : index
    %9 = vector.load %arg2[%c0_4, %c0_5, %c0_6] : memref<2x129x128xf32, #tpu.memory_space<vmem>>, vector<1x129x128xf32>
    %10 = vector.shape_cast %9 : vector<1x129x128xf32> to vector<129x128xf32>
    %11 = vector.extract_strided_slice %10 {offsets = [0, 0], sizes = [128, 128], strides = [1, 1]} : vector<129x128xf32> to vector<128x128xf32>
    %cst_7 = arith.constant dense<0.000000e+00> : vector<8x128xf32>
    %12 = tpu.matmul %8, %11, %cst_7 {dimension_numbers = #tpu.dot_dimension_numbers<[1], [0], [0], [1], [0, 0, 1, 1], [], []>} : vector<8x128xf32>, vector<128x128xf32>, vector<8x128xf32> -> vector<8x128xf32>
    %13 = vector.extract_strided_slice %10 {offsets = [128, 0], sizes = [1, 128], strides = [1, 1]} : vector<129x128xf32> to vector<1x128xf32>
    %14 = vector.broadcast %13 : vector<1x128xf32> to vector<8x128xf32>
    %15 = arith.addf %12, %14 : vector<8x128xf32>
    %cst_8 = arith.constant 0.000000e+00 : f32
    %16 = vector.broadcast %cst_8 : f32 to vector<8x128xf32>
    %17 = arith.maximumf %15, %16 : vector<8x128xf32>
    %c1 = arith.constant 1 : index
    %c0_9 = arith.constant 0 : index
    %c0_10 = arith.constant 0 : index
    %18 = vector.load %arg2[%c1, %c0_9, %c0_10] : memref<2x129x128xf32, #tpu.memory_space<vmem>>, vector<1x129x128xf32>
    %19 = vector.shape_cast %18 : vector<1x129x128xf32> to vector<129x128xf32>
    %20 = vector.extract_strided_slice %19 {offsets = [0, 0], sizes = [128, 128], strides = [1, 1]} : vector<129x128xf32> to vector<128x128xf32>
    %cst_11 = arith.constant dense<0.000000e+00> : vector<8x128xf32>
    %21 = tpu.matmul %17, %20, %cst_11 {dimension_numbers = #tpu.dot_dimension_numbers<[1], [0], [0], [1], [0, 0, 1, 1], [], []>} : vector<8x128xf32>, vector<128x128xf32>, vector<8x128xf32> -> vector<8x128xf32>
    %22 = vector.extract_strided_slice %19 {offsets = [128, 0], sizes = [1, 128], strides = [1, 1]} : vector<129x128xf32> to vector<1x128xf32>
    %23 = vector.broadcast %22 : vector<1x128xf32> to vector<8x128xf32>
    %24 = arith.addf %21, %23 : vector<8x128xf32>
    %c0_12 = arith.constant 0 : index
    %c0_13 = arith.constant 0 : index
    %25 = vector.load %arg3[%c0_12, %c0_13] : memref<129x2xf32, #tpu.memory_space<vmem>>, vector<129x2xf32>
    %26 = vector.extract_strided_slice %25 {offsets = [0, 0], sizes = [128, 2], strides = [1, 1]} : vector<129x2xf32> to vector<128x2xf32>
    %cst_14 = arith.constant dense<0.000000e+00> : vector<8x2xf32>
    %27 = tpu.matmul %24, %26, %cst_14 {dimension_numbers = #tpu.dot_dimension_numbers<[1], [0], [0], [1], [0, 0, 1, 1], [], []>} : vector<8x128xf32>, vector<128x2xf32>, vector<8x2xf32> -> vector<8x2xf32>
    %28 = vector.extract_strided_slice %25 {offsets = [128, 0], sizes = [1, 2], strides = [1, 1]} : vector<129x2xf32> to vector<1x2xf32>
    %29 = vector.broadcast %28 : vector<1x2xf32> to vector<8x2xf32>
    %30 = arith.addf %27, %29 : vector<8x2xf32>
    %31 = vector.extract_strided_slice %30 {offsets = [0, 0], sizes = [8, 1], strides = [1, 1]} : vector<8x2xf32> to vector<8x1xf32>
    %c0_15 = arith.constant 0 : index
    %c0_16 = arith.constant 0 : index
    %32 = vector.load %arg4[%c0_15, %c0_16] : memref<8x1xf32, #tpu.memory_space<vmem>>, vector<8x1xf32>
    tpu.vector_store %arg4[%c0_15, %c0_16], %31 {strides = array<i32>} : memref<8x1xf32, #tpu.memory_space<vmem>>, vector<8x1xf32>,
    %33 = vector.extract_strided_slice %30 {offsets = [0, 1], sizes = [8, 1], strides = [1, 1]} : vector<8x2xf32> to vector<8x1xf32>
    %cst_17 = arith.constant 0.000000e+00 : f32
    %34 = vector.broadcast %cst_17 : f32 to vector<8x1xf32>
    %35 = arith.maximumf %33, %34 : vector<8x1xf32>
    %36 = math.absf %33 : vector<8x1xf32>
    %cst_18 = arith.constant 0.000000e+00 : f32
    %37 = vector.broadcast %cst_18 : f32 to vector<8x1xf32>
    %38 = arith.subf %37, %36 : vector<8x1xf32>
    %39 = math.exp %38 : vector<8x1xf32>
    %40 = math.log1p %39 : vector<8x1xf32>
    %41 = arith.addf %35, %40 : vector<8x1xf32>
    %c0_19 = arith.constant 0 : index
    %c0_20 = arith.constant 0 : index
    %42 = vector.load %arg5[%c0_19, %c0_20] : memref<8x1xf32, #tpu.memory_space<vmem>>, vector<8x1xf32>
    tpu.vector_store %arg5[%c0_19, %c0_20], %41 {strides = array<i32>} : memref<8x1xf32, #tpu.memory_space<vmem>>, vector<8x1xf32>,
    return
  }
}

</mosaic_0001>

<llo_original>
// kernel: tpu_custom_call.1
$region0: #{tpu_custom_call.1}
  #allocation0 [shape = 'u32[]', space=smem, size = 0x4, offset = 0x4, fixed_abs, tag = 'smem constant byte address 0x4 - core index']
  #allocation1 [shape = 'u32[72,128]{1,0:T(1,128)}', space=vmem, size = 0x9000, scoped, tag = 'internal scratch']
  %s0 = inlined_call_operand.vmem [shape: f32[8,8], index: 0, kind: input, shape index: {}]
  %s1 = inlined_call_operand.vmem [shape: f32[9,128], index: 1, kind: input, shape index: {}]
  %s2 = inlined_call_operand.vmem [shape: f32[2,129,128], index: 2, kind: input, shape index: {}]
  %s3 = inlined_call_operand.vmem [shape: f32[129,2], index: 3, kind: input, shape index: {}]
  %s4 = inlined_call_operand.vmem [shape: f32[8,1], index: 4, kind: output, shape index: {0}]
  %s5 = inlined_call_operand.vmem [shape: f32[8,1], index: 5, kind: output, shape index: {1}]
  %6 = xla_tuple %s4, %s5
  %s7 = sld [smem:[#allocation0]]
  $region34: #{tpu_custom_call.1} parent=0
    _
  %s9 = ssub.s32 1, %s7
  %s10 = scalar_select 0, %s9, %s7
  // Predicated region
  $region2: #{tpu_custom_call.1} parent=0 // pred_check
    _
  $region3: #{tpu_custom_call.1} parent=0 // pred_check_branch
    %12 = sbr.rel (0) target = $region5
  $region4: #{tpu_custom_call.1} parent=0 // pred_region
    _
  $region5: #{tpu_custom_call.1} parent=0 // pred_fallthru
    _
  // Predicated region
  $region6: #{tpu_custom_call.1} parent=0 // pred_check
    _
  $region7: #{tpu_custom_call.1} parent=0 // pred_check_branch
    %14 = sbr.rel (0) target = $region9
  $region8: #{tpu_custom_call.1} parent=0 // pred_region
    _
  $region9: #{tpu_custom_call.1} parent=0 // pred_fallthru
    _
  // Predicated region
  $region10: #{tpu_custom_call.1} parent=0 // pred_check
    _
  $region11: #{tpu_custom_call.1} parent=0 // pred_check_branch
    %16 = sbr.rel (0) target = $region13
  $region12: #{tpu_custom_call.1} parent=0 // pred_region
    _
  $region13: #{tpu_custom_call.1} parent=0 // pred_fallthru
    _
  // Predicated region
  $region14: #{tpu_custom_call.1} parent=0 // pred_check
    _
  $region15: #{tpu_custom_call.1} parent=0 // pred_check_branch
    %18 = sbr.rel (0) target = $region17
  $region16: #{tpu_custom_call.1} parent=0 // pred_region
    _
  $region17: #{tpu_custom_call.1} parent=0 // pred_fallthru
    _
  %v19 = vld [vmem:[%s0] sm:$0xff]
  %v20 = vld [vmem:[%s1] sm:$0xff]
  %v21 = vld [vmem:[%s1 + $0x8] sm:$0x1]
  %v22 = vperm.slane %v21, 0
  %vm23 = vcmask 64512
  %v25 = vsel %vm23, %v19, 0
  %27 = vmatpush.msra.mxu0 0.0
  %28 = vmatpush.msra.mxu0 0.0
  %29 = vmatpush.msra.mxu0 0.0
  %30 = vmatpush.msra.mxu0 0.0
  %31 = vmatpush.msra.mxu0 0.0
  %32 = vmatpush.msra.mxu0 0.0
  %33 = vmatpush.msra.mxu0 0.0
  %34 = vmatpush.msra.mxu0 0.0
  %35 = vmatpush.msra.mxu0 0.0
  %36 = vmatpush.msra.mxu0 0.0
  %37 = vmatpush.msra.mxu0 0.0
  %38 = vmatpush.msra.mxu0 0.0
  %39 = vmatpush.msra.mxu0 0.0
  %40 = vmatpush.msra.mxu0 0.0
  %41 = vmatpush.msra.mxu0 0.0
  %42 = vmatpush.msra.mxu0 %v20
  %43 = vmatmul.f32.gmra.mxu0 %v25
  %v44 = vpop.f32.mrf.mxu0
  %v45 = vadd.f32 %v22, %v44
  %46 = vdwg.mxu0
  %v47 = vmax.f32 %v45, 0.0
  %v48 = vld [vmem:[%s2] sm:$0xff]
  %v49 = vld [vmem:[%s2 + $0x8] sm:$0xff]
  %v50 = vld [vmem:[%s2 + $0x10] sm:$0xff]
  %v51 = vld [vmem:[%s2 + $0x18] sm:$0xff]
  %v52 = vld [vmem:[%s2 + $0x20] sm:$0xff]
  %v53 = vld [vmem:[%s2 + $0x28] sm:$0xff]
  %v54 = vld [vmem:[%s2 + $0x30] sm:$0xff]
  %v55 = vld [vmem:[%s2 + $0x38] sm:$0xff]
  %v56 = vld [vmem:[%s2 + $0x40] sm:$0xff]
  %v57 = vld [vmem:[%s2 + $0x48] sm:$0xff]
  %v58 = vld [vmem:[%s2 + $0x50] sm:$0xff]
  %v59 = vld [vmem:[%s2 + $0x58] sm:$0xff]
  %v60 = vld [vmem:[%s2 + $0x60] sm:$0xff]
  %v61 = vld [vmem:[%s2 + $0x68] sm:$0xff]
  %v62 = vld [vmem:[%s2 + $0x70] sm:$0xff]
  %v63 = vld [vmem:[%s2 + $0x78] sm:$0xff]
  %v64 = vld [vmem:[%s2 + $0x80] sm:$0x1]
  %v65 = vperm.slane %v64, 0
  %66 = vmatpush.msra.mxu0 %v63
  %67 = vmatpush.msra.mxu0 %v62
  %68 = vmatpush.msra.mxu0 %v61
  %69 = vmatpush.msra.mxu0 %v60
  %70 = vmatpush.msra.mxu0 %v59
  %71 = vmatpush.msra.mxu0 %v58
  %72 = vmatpush.msra.mxu0 %v57
  %73 = vmatpush.msra.mxu0 %v56
  %74 = vmatpush.msra.mxu0 %v55
  %75 = vmatpush.msra.mxu0 %v54
  %76 = vmatpush.msra.mxu0 %v53
  %77 = vmatpush.msra.mxu0 %v52
  %78 = vmatpush.msra.mxu0 %v51
  %79 = vmatpush.msra.mxu0 %v50
  %80 = vmatpush.msra.mxu0 %v49
  %81 = vmatpush.msra.mxu0 %v48
  %82 = vmatmul.f32.gmra.mxu0 %v47
  %v83 = vpop.f32.mrf.mxu0
  %v84 = vadd.f32 %v65, %v83
  %85 = vdwg.mxu0
  %v86 = vmax.f32 %v84, 0.0
  %s87 = scalar_lea.vmem %s2, 136
  %v88 = vld [vmem:[%s87] sm:$0xff]
  %v89 = vld [vmem:[%s87 + $0x8] sm:$0xff]
  %v90 = vld [vmem:[%s87 + $0x10] sm:$0xff]
  %v91 = vld [vmem:[%s87 + $0x18] sm:$0xff]
  %v92 = vld [vmem:[%s87 + $0x20] sm:$0xff]
  %v93 = vld [vmem:[%s87 + $0x28] sm:$0xff]
  %v94 = vld [vmem:[%s87 + $0x30] sm:$0xff]
  %v95 = vld [vmem:[%s87 + $0x38] sm:$0xff]
  %v96 = vld [vmem:[%s87 + $0x40] sm:$0xff]
  %v97 = vld [vmem:[%s87 + $0x48] sm:$0xff]
  %v98 = vld [vmem:[%s87 + $0x50] sm:$0xff]
  %v99 = vld [vmem:[%s87 + $0x58] sm:$0xff]
  %v100 = vld [vmem:[%s87 + $0x60] sm:$0xff]
  %v101 = vld [vmem:[%s87 + $0x68] sm:$0xff]
  %v102 = vld [vmem:[%s87 + $0x70] sm:$0xff]
  %v103 = vld [vmem:[%s87 + $0x78] sm:$0xff]
  %v104 = vld [vmem:[%s87 + $0x80] sm:$0x1]
  %v105 = vperm.slane %v104, 0
  %106 = vmatpush.msra.mxu0 %v103
  %107 = vmatpush.msra.mxu0 %v102
  %108 = vmatpush.msra.mxu0 %v101
  %109 = vmatpush.msra.mxu0 %v100
  %110 = vmatpush.msra.mxu0 %v99
  %111 = vmatpush.msra.mxu0 %v98
  %112 = vmatpush.msra.mxu0 %v97
  %113 = vmatpush.msra.mxu0 %v96
  %114 = vmatpush.msra.mxu0 %v95
  %115 = vmatpush.msra.mxu0 %v94
  %116 = vmatpush.msra.mxu0 %v93
  %117 = vmatpush.msra.mxu0 %v92
  %118 = vmatpush.msra.mxu0 %v91
  %119 = vmatpush.msra.mxu0 %v90
  %120 = vmatpush.msra.mxu0 %v89
  %121 = vmatpush.msra.mxu0 %v88
  %122 = vmatmul.f32.gmra.mxu0 %v86
  %v123 = vpop.f32.mrf.mxu0
  %v124 = vadd.f32 %v105, %v123
  %125 = vdwg.mxu0
  %v126 = vld [vmem:[%s3] sm:$0xff]
  %v127 = vld [vmem:[%s3 + $0x8] sm:$0xff]
  %v128 = vld [vmem:[%s3 + $0x10] sm:$0xff]
  %v129 = vld [vmem:[%s3 + $0x18] sm:$0xff]
  %v130 = vld [vmem:[%s3 + $0x20] sm:$0xff]
  %v131 = vld [vmem:[%s3 + $0x28] sm:$0xff]
  %v132 = vld [vmem:[%s3 + $0x30] sm:$0xff]
  %v133 = vld [vmem:[%s3 + $0x38] sm:$0xff]
  %v134 = vld [vmem:[%s3 + $0x40] sm:$0xff]
  %v135 = vld [vmem:[%s3 + $0x48] sm:$0xff]
  %v136 = vld [vmem:[%s3 + $0x50] sm:$0xff]
  %v137 = vld [vmem:[%s3 + $0x58] sm:$0xff]
  %v138 = vld [vmem:[%s3 + $0x60] sm:$0xff]
  %v139 = vld [vmem:[%s3 + $0x68] sm:$0xff]
  %v140 = vld [vmem:[%s3 + $0x70] sm:$0xff]
  %v141 = vld [vmem:[%s3 + $0x78] sm:$0xff]
  %v142 = vld [vmem:[%s3 + $0x80] sm:$0x1]
  %v143 = vperm.slane %v142, 0
  %144 = vmatpush.msra.mxu0 %v141
  %145 = vmatpush.msra.mxu0 %v140
  %146 = vmatpush.msra.mxu0 %v139
  %147 = vmatpush.msra.mxu0 %v138
  %148 = vmatpush.msra.mxu0 %v137
  %149 = vmatpush.msra.mxu0 %v136
  %150 = vmatpush.msra.mxu0 %v135
  %151 = vmatpush.msra.mxu0 %v134
  %152 = vmatpush.msra.mxu0 %v133
  %153 = vmatpush.msra.mxu0 %v132
  %154 = vmatpush.msra.mxu0 %v131
  %155 = vmatpush.msra.mxu0 %v130
  %156 = vmatpush.msra.mxu0 %v129
  %157 = vmatpush.msra.mxu0 %v128
  %158 = vmatpush.msra.mxu0 %v127
  %159 = vmatpush.msra.mxu0 %v126
  %160 = vmatmul.f32.gmra.mxu0 %v124
  %v161 = vpop.f32.mrf.mxu0
  %v162 = vadd.f32 %v143, %v161
  %163 = vdwg.mxu0
  %vm164 = vcmask 7168
  %165 = vst.msk [vmem:[%s4] sm:$0xff] %vm164, %v162
  %v166 = vmax.f32 %v162, 0.0
  %v167 = vand.u32 2147483647, %v162
  %v168 = vsub.f32 0.0, %v167
  %v169 = vmul.f32 %v168, 1.442695
  %v170 = vpow.pop %v169
  %v171 = vadd.f32 %v170, 1.0
  %v172 = vlog2.pop %v171
  %v173 = vmul.f32 %v172, 0.6931472
  %v174 = vmul.f32 -0.5, %v170
  %v175 = vadd.f32 %v174, 1.0
  %v176 = vmul.f32 %v175, %v170
  %v177 = vand.u32 2147483647, %v170
  %vm178 = vcmp.lt.f32.partialorder %v177, 0.0004427343
  %v179 = vsel %vm178, %v176, %v173
  %v180 = vadd.f32 %v166, %v179
  %182 = vrot.lane.b32.xlu0 %v180, 127
  %v183 = vpop.permute.xlu0 %182
  %185 = vst.msk [vmem:[%s5] sm:$0xff] %vm164, %v183
  // Predicated region
  $region18: #{tpu_custom_call.1} parent=0 // pred_check
    _
  $region19: #{tpu_custom_call.1} parent=0 // pred_check_branch
    %187 = sbr.rel (0) target = $region21
  $region20: #{tpu_custom_call.1} parent=0 // pred_region
    _
  $region21: #{tpu_custom_call.1} parent=0 // pred_fallthru
    _
  // Predicated region
  $region22: #{tpu_custom_call.1} parent=0 // pred_check
    _
  $region23: #{tpu_custom_call.1} parent=0 // pred_check_branch
    %189 = sbr.rel (0) target = $region25
  $region24: #{tpu_custom_call.1} parent=0 // pred_region
    _
  $region25: #{tpu_custom_call.1} parent=0 // pred_fallthru
    _
  // Predicated region
  $region26: #{tpu_custom_call.1} parent=0 // pred_check
    _
  $region27: #{tpu_custom_call.1} parent=0 // pred_check_branch
    %191 = sbr.rel (0) target = $region29
  $region28: #{tpu_custom_call.1} parent=0 // pred_region
    _
  $region29: #{tpu_custom_call.1} parent=0 // pred_fallthru
    _
  // Predicated region
  $region30: #{tpu_custom_call.1} parent=0 // pred_check
    _
  $region31: #{tpu_custom_call.1} parent=0 // pred_check_branch
    %193 = sbr.rel (0) target = $region33
  $region32: #{tpu_custom_call.1} parent=0 // pred_region
    _
  $region33: #{tpu_custom_call.1} parent=0 // pred_fallthru
    _

</llo_original>
